<compile_context>
chip_gen: v7x
topology: tpu7x:2x2x1
jax: 0.10.0
libtpu: 0.0.40
codegen_flags: <defaults>
</compile_context>

<pallas_src>
import jax
import jax.numpy as jnp
from jax.experimental import pallas as pl
from jax.experimental.pallas import tpu as pltpu


def _ceil_to(x, m):
    return (x + m - 1) // m * m


def _vmem_capacity_bytes():
    """Generation-aware physical VMEM (128 MiB v5e/v6e, 64 MiB v7x)."""
    try:
        return int(pltpu.get_tpu_info().vmem_capacity_bytes)
    except Exception:
        return 64 << 20  # conservative fallback (v7x-sized / interpret mode)


def squeeze_excite_fusion_add(rgb, depth, params):
    """rgb, depth: (B, C, H, W) float32 or bfloat16 (NCHW). Returns (B, C, H, W)."""
    B, C, H, W = rgb.shape
    HW = H * W

    # Metadata-only reshapes; no pad, no output slice (pure 2R + 1W HBM traffic).
    rgb_f = rgb.reshape(B, C, HW)
    depth_f = depth.reshape(B, C, HW)

    # params come in PyTorch Conv2d-style shapes:
    #   w1: (hid, C), b1: (hid, 1), w2: (C, hid), b2: (C, 1)
    (w1r, b1r, w2r, b2r, w1d, b1d, w2d, b2d) = params
    hid = w1r.shape[0]

    # Re-lay-out for the MXU-free gate:
    #   layer 1:  (C,hid) weight * (C,1) pooled column -> sublane-reduce -> (1,hid) row
    #   layer 2:  (C,hid) weight * (1,hid) h row       -> lane-reduce    -> (C,1) column
    w1r_t, b1r_row = w1r.T, b1r.reshape(1, hid)
    w2r_n, b2r_col = w2r, b2r.reshape(C, 1)
    w1d_t, b1d_row = w1d.T, b1d.reshape(1, hid)
    w2d_n, b2d_col = w2d, b2d.reshape(C, 1)

    inv_hw = 1.0 / float(HW)  # Python float -> literal in the kernel jaxpr (no captured const)

    def kernel(rgb_ref, depth_ref,
               w1r_ref, b1r_ref, w2r_ref, b2r_ref,
               w1d_ref, b1d_ref, w2d_ref, b2d_ref,
               out_ref):
        rgb_x = rgb_ref[0]      # (C, HW), native I/O dtype
        depth_x = depth_ref[0]  # (C, HW), native I/O dtype

        def se_scale(x, w1_t, b1_row, w2, b2_col):
            # Gate math is f32, but only on tiny (C,1)/(1,hid) tiles — never a
            # slab-sized upcast (the cast fuses into the lane reduce).
            pooled_col = jnp.sum(x.astype(jnp.float32), axis=-1, keepdims=True) * inv_hw
            # FC1 + ReLU: (C,hid)*(C,1) -> sublane-reduce -> (1,hid)
            h_row = jnp.sum(w1_t[...] * pooled_col, axis=0, keepdims=True) + b1_row[...]
            h_row = jnp.maximum(h_row, 0.0)
            # FC2 + sigmoid: (C,hid)*(1,hid) -> lane-reduce -> (C,1)
            s_col = jnp.sum(w2[...] * h_row, axis=1, keepdims=True) + b2_col[...]
            return jax.nn.sigmoid(s_col).astype(x.dtype)   # (C,1) gate in I/O dtype

        s_rgb = se_scale(rgb_x, w1r_ref, b1r_ref, w2r_ref, b2r_ref)
        s_dep = se_scale(depth_x, w1d_ref, b1d_ref, w2d_ref, b2d_ref)
        # Slab-wide channel reweight + fusion add in the native dtype
        # (no whole-slab f32 intermediate, no final astype).
        out_ref[0] = rgb_x * s_rgb + depth_x * s_dep

    # ---- Generation-aware VMEM budget with (8,128)-padded tile estimates ----
    itemsize = jnp.dtype(rgb.dtype).itemsize
    sublane = max(1, 32 // (8 * itemsize)) * 8          # 8 for f32, 16 for bf16
    slab = _ceil_to(C, sublane) * _ceil_to(HW, 128) * itemsize
    w_tile = _ceil_to(C, 8) * _ceil_to(hid, 128) * 4
    b1_tile = 8 * _ceil_to(hid, 128) * 4
    b2_tile = _ceil_to(C, 8) * 128 * 4
    weight_bytes = 2 * 2 * (2 * w_tile + b1_tile + b2_tile)   # 2 branches, double-buffered
    vmem_needed = 6 * slab + weight_bytes + (4 << 20)          # 2 in + 1 out, 2 buffers each
    cap = int(0.875 * _vmem_capacity_bytes())                  # headroom for Mosaic scratch
    vmem_limit = int(min(max(vmem_needed, 32 << 20), cap))
    # TODO(synk): on v7x (64 MiB VMEM), if 6*slab still exceeds the cap, first trim
    # resident buffers with pipeline_mode=pl.Buffered(1) on the output (then input)
    # data specs and the constant weight specs (4 -> 3 slabs), and only then fall
    # back to a two-pass pool/gate + spatially tiled (512-1024 lane) reweight kernel.

    data_spec = pl.BlockSpec((1, C, HW), lambda b: (b, 0, 0))
    full = lambda shape: pl.BlockSpec(shape, lambda b: tuple(0 for _ in shape))

    out = pl.pallas_call(
        kernel,
        out_shape=jax.ShapeDtypeStruct((B, C, HW), rgb.dtype),
        grid_spec=pltpu.PrefetchScalarGridSpec(
            num_scalar_prefetch=0,
            grid=(B,),   # batch-parallel; keep B >= 2 on v7x so both TensorCores get work
            in_specs=[
                data_spec, data_spec,
                full((C, hid)), full((1, hid)), full((C, hid)), full((C, 1)),
                full((C, hid)), full((1, hid)), full((C, hid)), full((C, 1)),
            ],
            out_specs=data_spec,
        ),
        compiler_params=pltpu.CompilerParams(
            dimension_semantics=("parallel",),
            vmem_limit_bytes=vmem_limit),
    )(rgb_f, depth_f,
      w1r_t, b1r_row, w2r_n, b2r_col,
      w1d_t, b1d_row, w2d_n, b2d_col)

    return out.reshape(B, C, H, W)


def _reference(rgb, depth, params):
    (w1r, b1r, w2r, b2r, w1d, b1d, w2d, b2d) = params

    def se(x, w1, b1, w2, b2):
        pooled = jnp.mean(x, axis=(2, 3))                       # (B, C)
        h = jnp.maximum(pooled @ w1.T + b1[:, 0], 0.0)          # (B, hid)
        s = jax.nn.sigmoid(h @ w2.T + b2[:, 0])                 # (B, C)
        return x * s[:, :, None, None]

    return se(rgb, w1r, b1r, w2r, b2r) + se(depth, w1d, b1d, w2d, b2d)


def _init_params(key, channels, reduction=16):
    hid = channels // reduction
    assert hid >= 1, "channels_in must be >= reduction (16)"
    ks = jax.random.split(key, 8)
    scale1 = 1.0 / jnp.sqrt(channels)
    scale2 = 1.0 / jnp.sqrt(hid)
    # Conv2d(C, C//r, 1) weight (hid, C, 1, 1) -> (hid, C); bias (hid,) -> (hid, 1)
    w1r = jax.random.normal(ks[0], (hid, channels), jnp.float32) * scale1
    b1r = jax.random.normal(ks[1], (hid, 1), jnp.float32) * scale1
    w2r = jax.random.normal(ks[2], (channels, hid), jnp.float32) * scale2
    b2r = jax.random.normal(ks[3], (channels, 1), jnp.float32) * scale2
    w1d = jax.random.normal(ks[4], (hid, channels), jnp.float32) * scale1
    b1d = jax.random.normal(ks[5], (hid, 1), jnp.float32) * scale1
    w2d = jax.random.normal(ks[6], (channels, hid), jnp.float32) * scale2
    b2d = jax.random.normal(ks[7], (channels, 1), jnp.float32) * scale2
    return (w1r, b1r, w2r, b2r, w1d, b1d, w2d, b2d)


if __name__ == "__main__":
    key = jax.random.PRNGKey(0)
    k_rgb, k_depth, k_params = jax.random.split(key, 3)

    B, C, H, W = 2, 32, 16, 16     # channels_in=32 -> hidden = 32 // 16 = 2
    rgb = jax.random.normal(k_rgb, (B, C, H, W), jnp.float32)
    depth = jax.random.normal(k_depth, (B, C, H, W), jnp.float32)
    params = _init_params(k_params, C)

    # 1) f32, 128-aligned spatial (16*16 = 256).
    out = jax.block_until_ready(squeeze_excite_fusion_add(rgb, depth, params))
    ref = _reference(rgb, depth, params)
    assert out.shape == (B, C, H, W)
    assert jnp.allclose(out, ref, atol=1e-5, rtol=1e-5), "f32 aligned mismatch"

    # 2) f32, non-128-aligned spatial (7*9 = 63) — handled without any wrapper
    #    pad/slice; the kernel masks the ragged lane tail.
    rgb_u = jax.random.normal(k_rgb, (B, C, 7, 9), jnp.float32)
    depth_u = jax.random.normal(k_depth, (B, C, 7, 9), jnp.float32)
    out_u = jax.block_until_ready(squeeze_excite_fusion_add(rgb_u, depth_u, params))
    ref_u = _reference(rgb_u, depth_u, params)
    assert jnp.allclose(out_u, ref_u, atol=1e-5, rtol=1e-5), "f32 ragged mismatch"

    # 3) bf16 I/O (halves HBM traffic — the main win on v5e); gate math stays f32,
    #    reweight/add run in bf16.
    rgb_b = rgb.astype(jnp.bfloat16)
    depth_b = depth.astype(jnp.bfloat16)
    out_b = jax.block_until_ready(squeeze_excite_fusion_add(rgb_b, depth_b, params))
    ref_b = _reference(rgb_b.astype(jnp.float32), depth_b.astype(jnp.float32), params)
    assert out_b.dtype == jnp.bfloat16
    assert jnp.allclose(out_b.astype(jnp.float32), ref_b, atol=5e-2, rtol=5e-2), \
        "bf16 mismatch"

    print("KERNEL_OK")
</pallas_src>

<mosaic_0001>
module attributes {stable_mosaic.version = 11 : i64} {
  func.func @kernel(%arg0: i32, %arg1: memref<1x32x256xf32, #tpu.memory_space<vmem>>, %arg2: memref<1x32x256xf32, #tpu.memory_space<vmem>>, %arg3: memref<32x2xf32, #tpu.memory_space<vmem>>, %arg4: memref<1x2xf32, #tpu.memory_space<vmem>>, %arg5: memref<32x2xf32, #tpu.memory_space<vmem>>, %arg6: memref<32x1xf32, #tpu.memory_space<vmem>>, %arg7: memref<32x2xf32, #tpu.memory_space<vmem>>, %arg8: memref<1x2xf32, #tpu.memory_space<vmem>>, %arg9: memref<32x2xf32, #tpu.memory_space<vmem>>, %arg10: memref<32x1xf32, #tpu.memory_space<vmem>>, %arg11: memref<1x32x256xf32, #tpu.memory_space<vmem>>) attributes {dimension_semantics = [#tpu.dimension_semantics<parallel>], iteration_bounds = array<i64: 2>, scalar_prefetch = 0 : i64, scratch_operands = 0 : i64, tpu.core_type = #tpu.core_type<tc>, window_params = [{transform_indices = @transform_0, window_bounds = array<i64: 1, 32, 256>}, {transform_indices = @transform_1, window_bounds = array<i64: 1, 32, 256>}, {pipeline_mode = #tpu.pipeline_mode<synchronous>, transform_indices = @transform_2, window_bounds = array<i64: 32, 2>}, {pipeline_mode = #tpu.pipeline_mode<synchronous>, transform_indices = @transform_3, window_bounds = array<i64: 1, 2>}, {pipeline_mode = #tpu.pipeline_mode<synchronous>, transform_indices = @transform_4, window_bounds = array<i64: 32, 2>}, {pipeline_mode = #tpu.pipeline_mode<synchronous>, transform_indices = @transform_5, window_bounds = array<i64: 32, 1>}, {pipeline_mode = #tpu.pipeline_mode<synchronous>, transform_indices = @transform_6, window_bounds = array<i64: 32, 2>}, {pipeline_mode = #tpu.pipeline_mode<synchronous>, transform_indices = @transform_7, window_bounds = array<i64: 1, 2>}, {pipeline_mode = #tpu.pipeline_mode<synchronous>, transform_indices = @transform_8, window_bounds = array<i64: 32, 2>}, {pipeline_mode = #tpu.pipeline_mode<synchronous>, transform_indices = @transform_9, window_bounds = array<i64: 32, 1>}, {transform_indices = @transform_10, window_bounds = array<i64: 1, 32, 256>}]} {
    %c0 = arith.constant 0 : index
    %c0_0 = arith.constant 0 : index
    %c0_1 = arith.constant 0 : index
    %0 = vector.load %arg1[%c0, %c0_0, %c0_1] : memref<1x32x256xf32, #tpu.memory_space<vmem>>, vector<1x32x256xf32>
    %1 = vector.shape_cast %0 : vector<1x32x256xf32> to vector<32x256xf32>
    %c0_2 = arith.constant 0 : index
    %c0_3 = arith.constant 0 : index
    %c0_4 = arith.constant 0 : index
    %2 = vector.load %arg2[%c0_2, %c0_3, %c0_4] : memref<1x32x256xf32, #tpu.memory_space<vmem>>, vector<1x32x256xf32>
    %3 = vector.shape_cast %2 : vector<1x32x256xf32> to vector<32x256xf32>
    %cst = arith.constant dense<0.000000e+00> : vector<32xf32>
    %4 = vector.multi_reduction <add>, %1, %cst [1] : vector<32x256xf32> to vector<32xf32>
    %5 = vector.shape_cast %4 : vector<32xf32> to vector<32x1xf32>
    %cst_5 = arith.constant 3.906250e-03 : f32
    %6 = vector.broadcast %cst_5 : f32 to vector<32x1xf32>
    %7 = arith.mulf %5, %6 : vector<32x1xf32>
    %c0_6 = arith.constant 0 : index
    %c0_7 = arith.constant 0 : index
    %8 = vector.load %arg3[%c0_6, %c0_7] : memref<32x2xf32, #tpu.memory_space<vmem>>, vector<32x2xf32>
    %9 = vector.broadcast %7 : vector<32x1xf32> to vector<32x2xf32>
    %10 = arith.mulf %8, %9 : vector<32x2xf32>
    %cst_8 = arith.constant dense<0.000000e+00> : vector<2xf32>
    %11 = vector.multi_reduction <add>, %10, %cst_8 [0] : vector<32x2xf32> to vector<2xf32>
    %12 = vector.shape_cast %11 : vector<2xf32> to vector<1x2xf32>
    %c0_9 = arith.constant 0 : index
    %c0_10 = arith.constant 0 : index
    %13 = vector.load %arg4[%c0_9, %c0_10] : memref<1x2xf32, #tpu.memory_space<vmem>>, vector<1x2xf32>
    %14 = arith.addf %12, %13 : vector<1x2xf32>
    %cst_11 = arith.constant 0.000000e+00 : f32
    %15 = vector.broadcast %cst_11 : f32 to vector<1x2xf32>
    %16 = arith.maximumf %14, %15 : vector<1x2xf32>
    %c0_12 = arith.constant 0 : index
    %c0_13 = arith.constant 0 : index
    %17 = vector.load %arg5[%c0_12, %c0_13] : memref<32x2xf32, #tpu.memory_space<vmem>>, vector<32x2xf32>
    %18 = vector.broadcast %16 : vector<1x2xf32> to vector<32x2xf32>
    %19 = arith.mulf %17, %18 : vector<32x2xf32>
    %cst_14 = arith.constant dense<0.000000e+00> : vector<32xf32>
    %20 = vector.multi_reduction <add>, %19, %cst_14 [1] : vector<32x2xf32> to vector<32xf32>
    %21 = vector.shape_cast %20 : vector<32xf32> to vector<32x1xf32>
    %c0_15 = arith.constant 0 : index
    %c0_16 = arith.constant 0 : index
    %22 = vector.load %arg6[%c0_15, %c0_16] : memref<32x1xf32, #tpu.memory_space<vmem>>, vector<32x1xf32>
    %23 = arith.addf %21, %22 : vector<32x1xf32>
    %24 = arith.negf %23 : vector<32x1xf32>
    %25 = math.exp %24 : vector<32x1xf32>
    %cst_17 = arith.constant 1.000000e+00 : f32
    %26 = vector.broadcast %cst_17 : f32 to vector<32x1xf32>
    %27 = arith.addf %26, %25 : vector<32x1xf32>
    %28 = arith.divf %26, %27 : vector<32x1xf32>
    %cst_18 = arith.constant dense<0.000000e+00> : vector<32xf32>
    %29 = vector.multi_reduction <add>, %3, %cst_18 [1] : vector<32x256xf32> to vector<32xf32>
    %30 = vector.shape_cast %29 : vector<32xf32> to vector<32x1xf32>
    %cst_19 = arith.constant 3.906250e-03 : f32
    %31 = vector.broadcast %cst_19 : f32 to vector<32x1xf32>
    %32 = arith.mulf %30, %31 : vector<32x1xf32>
    %c0_20 = arith.constant 0 : index
    %c0_21 = arith.constant 0 : index
    %33 = vector.load %arg7[%c0_20, %c0_21] : memref<32x2xf32, #tpu.memory_space<vmem>>, vector<32x2xf32>
    %34 = vector.broadcast %32 : vector<32x1xf32> to vector<32x2xf32>
    %35 = arith.mulf %33, %34 : vector<32x2xf32>
    %cst_22 = arith.constant dense<0.000000e+00> : vector<2xf32>
    %36 = vector.multi_reduction <add>, %35, %cst_22 [0] : vector<32x2xf32> to vector<2xf32>
    %37 = vector.shape_cast %36 : vector<2xf32> to vector<1x2xf32>
    %c0_23 = arith.constant 0 : index
    %c0_24 = arith.constant 0 : index
    %38 = vector.load %arg8[%c0_23, %c0_24] : memref<1x2xf32, #tpu.memory_space<vmem>>, vector<1x2xf32>
    %39 = arith.addf %37, %38 : vector<1x2xf32>
    %cst_25 = arith.constant 0.000000e+00 : f32
    %40 = vector.broadcast %cst_25 : f32 to vector<1x2xf32>
    %41 = arith.maximumf %39, %40 : vector<1x2xf32>
    %c0_26 = arith.constant 0 : index
    %c0_27 = arith.constant 0 : index
    %42 = vector.load %arg9[%c0_26, %c0_27] : memref<32x2xf32, #tpu.memory_space<vmem>>, vector<32x2xf32>
    %43 = vector.broadcast %41 : vector<1x2xf32> to vector<32x2xf32>
    %44 = arith.mulf %42, %43 : vector<32x2xf32>
    %cst_28 = arith.constant dense<0.000000e+00> : vector<32xf32>
    %45 = vector.multi_reduction <add>, %44, %cst_28 [1] : vector<32x2xf32> to vector<32xf32>
    %46 = vector.shape_cast %45 : vector<32xf32> to vector<32x1xf32>
    %c0_29 = arith.constant 0 : index
    %c0_30 = arith.constant 0 : index
    %47 = vector.load %arg10[%c0_29, %c0_30] : memref<32x1xf32, #tpu.memory_space<vmem>>, vector<32x1xf32>
    %48 = arith.addf %46, %47 : vector<32x1xf32>
    %49 = arith.negf %48 : vector<32x1xf32>
    %50 = math.exp %49 : vector<32x1xf32>
    %cst_31 = arith.constant 1.000000e+00 : f32
    %51 = vector.broadcast %cst_31 : f32 to vector<32x1xf32>
    %52 = arith.addf %51, %50 : vector<32x1xf32>
    %53 = arith.divf %51, %52 : vector<32x1xf32>
    %54 = vector.broadcast %28 : vector<32x1xf32> to vector<32x256xf32>
    %55 = arith.mulf %1, %54 : vector<32x256xf32>
    %56 = vector.broadcast %53 : vector<32x1xf32> to vector<32x256xf32>
    %57 = arith.mulf %3, %56 : vector<32x256xf32>
    %58 = arith.addf %55, %57 : vector<32x256xf32>
    %c0_32 = arith.constant 0 : index
    %c0_33 = arith.constant 0 : index
    %c0_34 = arith.constant 0 : index
    %59 = vector.load %arg11[%c0_32, %c0_33, %c0_34] : memref<1x32x256xf32, #tpu.memory_space<vmem>>, vector<1x32x256xf32>
    %60 = vector.shape_cast %59 : vector<1x32x256xf32> to vector<32x256xf32>
    %61 = vector.shape_cast %58 : vector<32x256xf32> to vector<1x32x256xf32>
    tpu.vector_store %arg11[%c0_32, %c0_33, %c0_34], %61 {strides = array<i32>} : memref<1x32x256xf32, #tpu.memory_space<vmem>>, vector<1x32x256xf32>,
    return
  }
  func.func @transform_0(%arg0: i32) -> (i32, i32, i32) {
    %c0_i32 = arith.constant 0 : i32
    %c0_i32_0 = arith.constant 0 : i32
    %c0_i32_1 = arith.constant 0 : i32
    return %arg0, %c0_i32, %c0_i32_0 : i32, i32, i32
  }
  func.func @transform_1(%arg0: i32) -> (i32, i32, i32) {
    %c0_i32 = arith.constant 0 : i32
    %c0_i32_0 = arith.constant 0 : i32
    %c0_i32_1 = arith.constant 0 : i32
    return %arg0, %c0_i32, %c0_i32_0 : i32, i32, i32
  }
  func.func @transform_2(%arg0: i32) -> (i32, i32) {
    %c0_i32 = arith.constant 0 : i32
    %c0_i32_0 = arith.constant 0 : i32
    %c0_i32_1 = arith.constant 0 : i32
    return %c0_i32, %c0_i32_0 : i32, i32
  }
  func.func @transform_3(%arg0: i32) -> (i32, i32) {
    %c0_i32 = arith.constant 0 : i32
    %c0_i32_0 = arith.constant 0 : i32
    %c0_i32_1 = arith.constant 0 : i32
    return %c0_i32, %c0_i32_0 : i32, i32
  }
  func.func @transform_4(%arg0: i32) -> (i32, i32) {
    %c0_i32 = arith.constant 0 : i32
    %c0_i32_0 = arith.constant 0 : i32
    %c0_i32_1 = arith.constant 0 : i32
    return %c0_i32, %c0_i32_0 : i32, i32
  }
  func.func @transform_5(%arg0: i32) -> (i32, i32) {
    %c0_i32 = arith.constant 0 : i32
    %c0_i32_0 = arith.constant 0 : i32
    %c0_i32_1 = arith.constant 0 : i32
    return %c0_i32, %c0_i32_0 : i32, i32
  }
  func.func @transform_6(%arg0: i32) -> (i32, i32) {
    %c0_i32 = arith.constant 0 : i32
    %c0_i32_0 = arith.constant 0 : i32
    %c0_i32_1 = arith.constant 0 : i32
    return %c0_i32, %c0_i32_0 : i32, i32
  }
  func.func @transform_7(%arg0: i32) -> (i32, i32) {
    %c0_i32 = arith.constant 0 : i32
    %c0_i32_0 = arith.constant 0 : i32
    %c0_i32_1 = arith.constant 0 : i32
    return %c0_i32, %c0_i32_0 : i32, i32
  }
  func.func @transform_8(%arg0: i32) -> (i32, i32) {
    %c0_i32 = arith.constant 0 : i32
    %c0_i32_0 = arith.constant 0 : i32
    %c0_i32_1 = arith.constant 0 : i32
    return %c0_i32, %c0_i32_0 : i32, i32
  }
  func.func @transform_9(%arg0: i32) -> (i32, i32) {
    %c0_i32 = arith.constant 0 : i32
    %c0_i32_0 = arith.constant 0 : i32
    %c0_i32_1 = arith.constant 0 : i32
    return %c0_i32, %c0_i32_0 : i32, i32
  }
  func.func @transform_10(%arg0: i32) -> (i32, i32, i32) {
    %c0_i32 = arith.constant 0 : i32
    %c0_i32_0 = arith.constant 0 : i32
    %c0_i32_1 = arith.constant 0 : i32
    return %arg0, %c0_i32, %c0_i32_0 : i32, i32, i32
  }
}

</mosaic_0001>

<llo_original>
// kernel: tpu_custom_call.1
$region0: #{tpu_custom_call.1}
  #allocation0 [shape = 'u32[]', space=smem, size = 0x4, offset = 0x4, fixed_abs, tag = 'smem constant byte address 0x4 - core index']
  #allocation1 [shape = 'u32[144,128]{1,0:T(1,128)}', space=vmem, size = 0x12000, scoped, tag = 'internal scratch']
  %s0 = inlined_call_operand.vmem [shape: f32[2,32,256], index: 0, kind: input, shape index: {}]
  %s1 = inlined_call_operand.hbm [shape: f32[2,32,256], index: 1, kind: input, shape index: {}]
  %s2 = inlined_call_operand.vmem [shape: f32[32,2], index: 2, kind: input, shape index: {}]
  %s3 = inlined_call_operand.vmem [shape: f32[1,2], index: 3, kind: input, shape index: {}]
  %s4 = inlined_call_operand.vmem [shape: f32[32,2], index: 4, kind: input, shape index: {}]
  %s5 = inlined_call_operand.vmem [shape: f32[32,1], index: 5, kind: input, shape index: {}]
  %s6 = inlined_call_operand.vmem [shape: f32[32,2], index: 6, kind: input, shape index: {}]
  %s7 = inlined_call_operand.vmem [shape: f32[1,2], index: 7, kind: input, shape index: {}]
  %s8 = inlined_call_operand.vmem [shape: f32[32,2], index: 8, kind: input, shape index: {}]
  %s9 = inlined_call_operand.vmem [shape: f32[32,1], index: 9, kind: input, shape index: {}]
  %s10 = inlined_call_operand.hbm [shape: f32[2,32,256], index: 10, kind: output, shape index: {}]
  %s11 = sld [smem:[#allocation0]]
  $region77: #{tpu_custom_call.1} parent=0
    _
  %s13 = ssub.s32 1, %s11
  %s14 = scalar_select 0, %s13, %s11
  $region1: #{tpu_custom_call.1} parent=0
    #allocation2 [shape = 'u8[65536]{0}', space=vmem, size = 0x10000, scoped, tag = 'input window, operand 1']
    #allocation3 [shape = 's32[2]{0}', space=sflag, size = 0x8, scoped, tag = 'scoped memory for tpu_custom_call.1']
    #allocation4 [shape = 's32[2]{0}', space=sflag, size = 0x8, scoped, tag = 'scoped memory for tpu_custom_call.1']
    #allocation5 [shape = 'u8[65536]{0}', space=vmem, size = 0x10000, scoped, tag = 'output window, operand 0']
    %15 = vsyncpa [#allocation3], 0
    %s16 = scalar_lea.sflag [#allocation3], 1
    %17 = vsyncpa %s16, 0
    %18 = vsyncpa [#allocation4], 0
    %s19 = scalar_lea.sflag [#allocation4], 1
    %20 = vsyncpa %s19, 0
    loop: start=0, step=1, limit=4
    $region2: #{tpu_custom_call.1} parent=1 // loop_pre_header
      _
    $region3: #{tpu_custom_call.1} parent=1 // loop_header
      %s22 = sphi 0, %s26
      %p23 = scmp.ge.s32.totalorder %s22, 4
      %s32 = sphi 0, %s34
      %s35 = sphi 0, %s32
      %s36 = sphi 0, %s35
      %s52 = sphi 0, %s36
      %s58 = sphi 0, %s60
      %s61 = sphi 0, %s58
      %s62 = sphi 0, %s61
      %s78 = sphi 0, %s62
      %s82 = sphi 0, %s82
      %s84 = sphi 0, %s82
      %s85 = sphi 0, %s84
      %s99 = sphi 0, %s85
      %s103 = sphi 0, %s103
      %s105 = sphi 0, %s103
      %s106 = sphi 0, %s105
      %s120 = sphi 0, %s106
      %s124 = sphi 0, %s124
      %s126 = sphi 0, %s124
      %s127 = sphi 0, %s126
      %s141 = sphi 0, %s127
      %s145 = sphi 0, %s145
      %s147 = sphi 0, %s145
      %s148 = sphi 0, %s147
      %s162 = sphi 0, %s148
      %s166 = sphi 0, %s166
      %s168 = sphi 0, %s166
      %s169 = sphi 0, %s168
      %s183 = sphi 0, %s169
      %s187 = sphi 0, %s187
      %s189 = sphi 0, %s187
      %s190 = sphi 0, %s189
      %s204 = sphi 0, %s190
      %s208 = sphi 0, %s208
      %s210 = sphi 0, %s208
      %s211 = sphi 0, %s210
      %s225 = sphi 0, %s211
      %s229 = sphi 0, %s229
      %s231 = sphi 0, %s229
      %s232 = sphi 0, %s231
      %s246 = sphi 0, %s232
      %s252 = sphi 0, %s254
      %s255 = sphi 0, %s252
      %s256 = sphi 0, %s255
      %s272 = sphi 0, %s256
    $region4: #{tpu_custom_call.1} parent=1 // loop_header_branch
      %25 = sbr.rel (%p23) target = $region8
    $region5: #{tpu_custom_call.1} parent=1 // loop_body
      %s27 = ssub.s32 %s22, 1
      %s28 = ssub.s32 %s22, 2
      %s29 = sadd.s32 %s22, 1
      %s30 = ssub.s32 %s22, %s29
      %p31 = scmp.eq.s32.totalorder %s30, 0
      %s33 = sadd.s32 %s32, 1
      %s34 = scalar_select %p31, %s32, %s33
      %p37 = pneg %p31
      %p38 = scmp.eq.s32.totalorder %s22, 1
      %p39 = por %p37, %p38
      %p40 = scmp.ne.s32.totalorder %s32, %s35
      %p41 = scmp.eq.s32.totalorder %s22, 0
      %p42 = por %p40, %p41
      %p43 = scmp.ne.s32.totalorder %s32, %s35
      %p44 = scmp.eq.s32.totalorder %s27, 1
      %p45 = por %p43, %p44
      %p46 = scmp.ne.s32.totalorder %s35, %s36
      %p47 = scmp.eq.s32.totalorder %s27, 0
      %p48 = por %p46, %p47
      %p49 = scmp.ne.s32.totalorder %s35, %s36
      %p50 = scmp.eq.s32.totalorder %s28, 1
      %p51 = por %p49, %p50
      %p53 = scmp.ne.s32.totalorder %s36, %s52
      %p54 = scmp.eq.s32.totalorder %s28, 0
      %p55 = por %p53, %p54
      %s56 = ssub.s32 %s22, %s29
      %p57 = scmp.eq.s32.totalorder %s56, 0
      %s59 = sadd.s32 %s58, 1
      %s60 = scalar_select %p57, %s58, %s59
      %p63 = pneg %p57
      %p64 = scmp.eq.s32.totalorder %s22, 1
      %p65 = por %p63, %p64
      %p66 = scmp.ne.s32.totalorder %s58, %s61
      %p67 = scmp.eq.s32.totalorder %s22, 0
      %p68 = por %p66, %p67
      %p69 = scmp.ne.s32.totalorder %s58, %s61
      %p70 = scmp.eq.s32.totalorder %s27, 1
      %p71 = por %p69, %p70
      %p72 = scmp.ne.s32.totalorder %s61, %s62
      %p73 = scmp.eq.s32.totalorder %s27, 0
      %p74 = por %p72, %p73
      %p75 = scmp.ne.s32.totalorder %s61, %s62
      %p76 = scmp.eq.s32.totalorder %s28, 1
      %p77 = por %p75, %p76
      %p79 = scmp.ne.s32.totalorder %s62, %s78
      %p80 = scmp.eq.s32.totalorder %s28, 0
      %p81 = por %p79, %p80
      %s83 = sadd.s32 %s82, 1
      %p86 = scmp.eq.s32.totalorder %s22, 1
      %p87 = scmp.ne.s32.totalorder %s82, %s84
      %p88 = scmp.eq.s32.totalorder %s22, 0
      %p89 = por %p87, %p88
      %p90 = scmp.ne.s32.totalorder %s82, %s84
      %p91 = scmp.eq.s32.totalorder %s27, 1
      %p92 = por %p90, %p91
      %p93 = scmp.ne.s32.totalorder %s84, %s85
      %p94 = scmp.eq.s32.totalorder %s27, 0
      %p95 = por %p93, %p94
      %p96 = scmp.ne.s32.totalorder %s84, %s85
      %p97 = scmp.eq.s32.totalorder %s28, 1
      %p98 = por %p96, %p97
      %p100 = scmp.ne.s32.totalorder %s85, %s99
      %p101 = scmp.eq.s32.totalorder %s28, 0
      %p102 = por %p100, %p101
      %s104 = sadd.s32 %s103, 1
      %p107 = scmp.eq.s32.totalorder %s22, 1
      %p108 = scmp.ne.s32.totalorder %s103, %s105
      %p109 = scmp.eq.s32.totalorder %s22, 0
      %p110 = por %p108, %p109
      %p111 = scmp.ne.s32.totalorder %s103, %s105
      %p112 = scmp.eq.s32.totalorder %s27, 1
      %p113 = por %p111, %p112
      %p114 = scmp.ne.s32.totalorder %s105, %s106
      %p115 = scmp.eq.s32.totalorder %s27, 0
      %p116 = por %p114, %p115
      %p117 = scmp.ne.s32.totalorder %s105, %s106
      %p118 = scmp.eq.s32.totalorder %s28, 1
      %p119 = por %p117, %p118
      %p121 = scmp.ne.s32.totalorder %s106, %s120
      %p122 = scmp.eq.s32.totalorder %s28, 0
      %p123 = por %p121, %p122
      %s125 = sadd.s32 %s124, 1
      %p128 = scmp.eq.s32.totalorder %s22, 1
      %p129 = scmp.ne.s32.totalorder %s124, %s126
      %p130 = scmp.eq.s32.totalorder %s22, 0
      %p131 = por %p129, %p130
      %p132 = scmp.ne.s32.totalorder %s124, %s126
      %p133 = scmp.eq.s32.totalorder %s27, 1
      %p134 = por %p132, %p133
      %p135 = scmp.ne.s32.totalorder %s126, %s127
      %p136 = scmp.eq.s32.totalorder %s27, 0
      %p137 = por %p135, %p136
      %p138 = scmp.ne.s32.totalorder %s126, %s127
      %p139 = scmp.eq.s32.totalorder %s28, 1
      %p140 = por %p138, %p139
      %p142 = scmp.ne.s32.totalorder %s127, %s141
      %p143 = scmp.eq.s32.totalorder %s28, 0
      %p144 = por %p142, %p143
      %s146 = sadd.s32 %s145, 1
      %p149 = scmp.eq.s32.totalorder %s22, 1
      %p150 = scmp.ne.s32.totalorder %s145, %s147
      %p151 = scmp.eq.s32.totalorder %s22, 0
      %p152 = por %p150, %p151
      %p153 = scmp.ne.s32.totalorder %s145, %s147
      %p154 = scmp.eq.s32.totalorder %s27, 1
      %p155 = por %p153, %p154
      %p156 = scmp.ne.s32.totalorder %s147, %s148
      %p157 = scmp.eq.s32.totalorder %s27, 0
      %p158 = por %p156, %p157
      %p159 = scmp.ne.s32.totalorder %s147, %s148
      %p160 = scmp.eq.s32.totalorder %s28, 1
      %p161 = por %p159, %p160
      %p163 = scmp.ne.s32.totalorder %s148, %s162
      %p164 = scmp.eq.s32.totalorder %s28, 0
      %p165 = por %p163, %p164
      %s167 = sadd.s32 %s166, 1
      %p170 = scmp.eq.s32.totalorder %s22, 1
      %p171 = scmp.ne.s32.totalorder %s166, %s168
      %p172 = scmp.eq.s32.totalorder %s22, 0
      %p173 = por %p171, %p172
      %p174 = scmp.ne.s32.totalorder %s166, %s168
      %p175 = scmp.eq.s32.totalorder %s27, 1
      %p176 = por %p174, %p175
      %p177 = scmp.ne.s32.totalorder %s168, %s169
      %p178 = scmp.eq.s32.totalorder %s27, 0
      %p179 = por %p177, %p178
      %p180 = scmp.ne.s32.totalorder %s168, %s169
      %p181 = scmp.eq.s32.totalorder %s28, 1
      %p182 = por %p180, %p181
      %p184 = scmp.ne.s32.totalorder %s169, %s183
      %p185 = scmp.eq.s32.totalorder %s28, 0
      %p186 = por %p184, %p185
      %s188 = sadd.s32 %s187, 1
      %p191 = scmp.eq.s32.totalorder %s22, 1
      %p192 = scmp.ne.s32.totalorder %s187, %s189
      %p193 = scmp.eq.s32.totalorder %s22, 0
      %p194 = por %p192, %p193
      %p195 = scmp.ne.s32.totalorder %s187, %s189
      %p196 = scmp.eq.s32.totalorder %s27, 1
      %p197 = por %p195, %p196
      %p198 = scmp.ne.s32.totalorder %s189, %s190
      %p199 = scmp.eq.s32.totalorder %s27, 0
      %p200 = por %p198, %p199
      %p201 = scmp.ne.s32.totalorder %s189, %s190
      %p202 = scmp.eq.s32.totalorder %s28, 1
      %p203 = por %p201, %p202
      %p205 = scmp.ne.s32.totalorder %s190, %s204
      %p206 = scmp.eq.s32.totalorder %s28, 0
      %p207 = por %p205, %p206
      %s209 = sadd.s32 %s208, 1
      %p212 = scmp.eq.s32.totalorder %s22, 1
      %p213 = scmp.ne.s32.totalorder %s208, %s210
      %p214 = scmp.eq.s32.totalorder %s22, 0
      %p215 = por %p213, %p214
      %p216 = scmp.ne.s32.totalorder %s208, %s210
      %p217 = scmp.eq.s32.totalorder %s27, 1
      %p218 = por %p216, %p217
      %p219 = scmp.ne.s32.totalorder %s210, %s211
      %p220 = scmp.eq.s32.totalorder %s27, 0
      %p221 = por %p219, %p220
      %p222 = scmp.ne.s32.totalorder %s210, %s211
      %p223 = scmp.eq.s32.totalorder %s28, 1
      %p224 = por %p222, %p223
      %p226 = scmp.ne.s32.totalorder %s211, %s225
      %p227 = scmp.eq.s32.totalorder %s28, 0
      %p228 = por %p226, %p227
      %s230 = sadd.s32 %s229, 1
      %p233 = scmp.eq.s32.totalorder %s22, 1
      %p234 = scmp.ne.s32.totalorder %s229, %s231
      %p235 = scmp.eq.s32.totalorder %s22, 0
      %p236 = por %p234, %p235
      %p237 = scmp.ne.s32.totalorder %s229, %s231
      %p238 = scmp.eq.s32.totalorder %s27, 1
      %p239 = por %p237, %p238
      %p240 = scmp.ne.s32.totalorder %s231, %s232
      %p241 = scmp.eq.s32.totalorder %s27, 0
      %p242 = por %p240, %p241
      %p243 = scmp.ne.s32.totalorder %s231, %s232
      %p244 = scmp.eq.s32.totalorder %s28, 1
      %p245 = por %p243, %p244
      %p247 = scmp.ne.s32.totalorder %s232, %s246
      %p248 = scmp.eq.s32.totalorder %s28, 0
      %p249 = por %p247, %p248
      %s250 = ssub.s32 %s22, %s29
      %p251 = scmp.eq.s32.totalorder %s250, 0
      %s253 = sadd.s32 %s252, 1
      %s254 = scalar_select %p251, %s252, %s253
      %p257 = pneg %p251
      %p258 = scmp.eq.s32.totalorder %s22, 1
      %p259 = por %p257, %p258
      %p260 = scmp.ne.s32.totalorder %s252, %s255
      %p261 = scmp.eq.s32.totalorder %s22, 0
      %p262 = por %p260, %p261
      %p263 = scmp.ne.s32.totalorder %s252, %s255
      %p264 = scmp.eq.s32.totalorder %s27, 1
      %p265 = por %p263, %p264
      %p266 = scmp.ne.s32.totalorder %s255, %s256
      %p267 = scmp.eq.s32.totalorder %s27, 0
      %p268 = por %p266, %p267
      %p269 = scmp.ne.s32.totalorder %s255, %s256
      %p270 = scmp.eq.s32.totalorder %s28, 1
      %p271 = por %p269, %p270
      %p273 = scmp.ne.s32.totalorder %s256, %s272
      %p274 = scmp.eq.s32.totalorder %s28, 0
      %p275 = por %p273, %p274
      %p276 = scmp.le.s32.totalorder 1, %s22
      %p277 = scmp.lt.s32.totalorder %s22, 3
      %p278 = pnand %p276, %p277
      %p279 = pneg %p278
      // Predicated region
      $region9: #{tpu_custom_call.1} parent=5 // pred_check
        _
      $region10: #{tpu_custom_call.1} parent=5 // pred_check_branch
        %281 = sbr.rel (%p278) target = $region12
      $region11: #{tpu_custom_call.1} parent=5 // pred_region
        %s282 = ssub.s32 %s22, 1
        // Predicated region
        $region13: #{tpu_custom_call.1} parent=11 // pred_check
          %p283 = pneg %p95
        $region14: #{tpu_custom_call.1} parent=11 // pred_check_branch
          %285 = sbr.rel (%p283) target = $region16
        $region15: #{tpu_custom_call.1} parent=11 // pred_region
          _
        $region16: #{tpu_custom_call.1} parent=11 // pred_fallthru
          _
        // Predicated region
        $region17: #{tpu_custom_call.1} parent=11 // pred_check
          %p286 = pneg %p116
        $region18: #{tpu_custom_call.1} parent=11 // pred_check_branch
          %288 = sbr.rel (%p286) target = $region20
        $region19: #{tpu_custom_call.1} parent=11 // pred_region
          _
        $region20: #{tpu_custom_call.1} parent=11 // pred_fallthru
          _
        // Predicated region
        $region21: #{tpu_custom_call.1} parent=11 // pred_check
          %p289 = pneg %p137
        $region22: #{tpu_custom_call.1} parent=11 // pred_check_branch
          %291 = sbr.rel (%p289) target = $region24
        $region23: #{tpu_custom_call.1} parent=11 // pred_region
          _
        $region24: #{tpu_custom_call.1} parent=11 // pred_fallthru
          _
        // Predicated region
        $region25: #{tpu_custom_call.1} parent=11 // pred_check
          %p292 = pneg %p158
        $region26: #{tpu_custom_call.1} parent=11 // pred_check_branch
          %294 = sbr.rel (%p292) target = $region28
        $region27: #{tpu_custom_call.1} parent=11 // pred_region
          _
        $region28: #{tpu_custom_call.1} parent=11 // pred_fallthru
          _
        // Predicated region
        $region29: #{tpu_custom_call.1} parent=11 // pred_check
          %p295 = pneg %p179
        $region30: #{tpu_custom_call.1} parent=11 // pred_check_branch
          %297 = sbr.rel (%p295) target = $region32
        $region31: #{tpu_custom_call.1} parent=11 // pred_region
          _
        $region32: #{tpu_custom_call.1} parent=11 // pred_fallthru
          _
        // Predicated region
        $region33: #{tpu_custom_call.1} parent=11 // pred_check
          %p298 = pneg %p200
        $region34: #{tpu_custom_call.1} parent=11 // pred_check_branch
          %300 = sbr.rel (%p298) target = $region36
        $region35: #{tpu_custom_call.1} parent=11 // pred_region
          _
        $region36: #{tpu_custom_call.1} parent=11 // pred_fallthru
          _
        // Predicated region
        $region37: #{tpu_custom_call.1} parent=11 // pred_check
          %p301 = pneg %p221
        $region38: #{tpu_custom_call.1} parent=11 // pred_check_branch
          %303 = sbr.rel (%p301) target = $region40
        $region39: #{tpu_custom_call.1} parent=11 // pred_region
          _
        $region40: #{tpu_custom_call.1} parent=11 // pred_fallthru
          _
        // Predicated region
        $region41: #{tpu_custom_call.1} parent=11 // pred_check
          %p304 = pneg %p242
        $region42: #{tpu_custom_call.1} parent=11 // pred_check_branch
          %306 = sbr.rel (%p304) target = $region44
        $region43: #{tpu_custom_call.1} parent=11 // pred_region
          _
        $region44: #{tpu_custom_call.1} parent=11 // pred_fallthru
          _
      $region12: #{tpu_custom_call.1} parent=5 // pred_fallthru
        _
      %p307 = scmp.lt.s32.totalorder %s22, 2
      // Predicated region
      $region45: #{tpu_custom_call.1} parent=5 // pred_check
        %p308 = pneg %p307
      $region46: #{tpu_custom_call.1} parent=5 // pred_check_branch
        %310 = sbr.rel (%p308) target = $region48
      $region47: #{tpu_custom_call.1} parent=5 // pred_region
        // Predicated region
        $region49: #{tpu_custom_call.1} parent=47 // pred_check
          %p311 = pneg %p42
        $region50: #{tpu_custom_call.1} parent=47 // pred_check_branch
          %313 = sbr.rel (%p311) target = $region52
        $region51: #{tpu_custom_call.1} parent=47 // pred_region
          %p314 = scmp.lt.s32.totalorder %s22, 1
          %s315 = scalar_select %p314, %s22, 1
          %s316 = smul.addr %s315, 8
          %s317 = smul.addr %s316, 8
          %s318 = scalar_lea.vmem %s0, %s317
        $region52: #{tpu_custom_call.1} parent=47 // pred_fallthru
          _
        // Predicated region
        $region53: #{tpu_custom_call.1} parent=47 // pred_check
          %p319 = pneg %p68
        $region54: #{tpu_custom_call.1} parent=47 // pred_check_branch
          %321 = sbr.rel (%p319) target = $region56
        $region55: #{tpu_custom_call.1} parent=47 // pred_region
          %s322 = sand.u32 %s58, 1
          %s323 = scalar_lea.sflag [#allocation3], %s322
          %s324 = sand.u32 %s58, 1
          %s325 = smul.addr %s324, 64
          %s326 = scalar_lea.vmem [#allocation2], %s325
          %s328 = ssub.s32 1024, 1024
          %329 = vsyncadd %s323, %s328
          %s330 = smul.addr %s22, 8
          %s331 = smul.addr %s330, 128
          %s332 = scalar_lea.hbm %s1, %s331
          %s333 = sshll.u32 %s326, 4
          %s334 = int_to_ptr.vmem [resolvable:$true] %s333
          %339 = dma.hbm_to_vmem [thread:$0]  %s332, 1024, %s334, %s323, 256, 256, 16
        $region56: #{tpu_custom_call.1} parent=47 // pred_fallthru
          _
      $region48: #{tpu_custom_call.1} parent=5 // pred_fallthru
        _
      %p340 = scmp.le.s32.totalorder 1, %s22
      %p341 = scmp.lt.s32.totalorder %s22, 3
      %p342 = pnand %p340, %p341
      %p343 = pneg %p342
      // Predicated region
      $region57: #{tpu_custom_call.1} parent=5 // pred_check
        _
      $region58: #{tpu_custom_call.1} parent=5 // pred_check_branch
        %345 = sbr.rel (%p342) target = $region60
      $region59: #{tpu_custom_call.1} parent=5 // pred_region
        %s346 = ssub.s32 %s22, 1
        %s347 = sand.u32 %s61, 1
        %s348 = scalar_lea.sflag [#allocation3], %s347
        %s349 = sand.u32 %s61, 1
        %s350 = smul.addr %s349, 64
        %s351 = scalar_lea.vmem [#allocation2], %s350
        // Predicated region
        $region61: #{tpu_custom_call.1} parent=59 // pred_check
          %p352 = pneg %p74
        $region62: #{tpu_custom_call.1} parent=59 // pred_check_branch
          %354 = sbr.rel (%p352) target = $region64
        $region63: #{tpu_custom_call.1} parent=59 // pred_region
          %355 = dma.done %s348, 1024
        $region64: #{tpu_custom_call.1} parent=59 // pred_fallthru
          _
        %p356 = scmp.lt.s32.totalorder %s27, 1
        %s357 = scalar_select %p356, %s27, 1
        %s358 = smul.addr %s357, 8
        %s359 = smul.addr %s358, 8
        %s360 = scalar_lea.vmem %s0, %s359
        %p361 = pneg %p48
        %p362 = pneg %p45
        %s363 = sand.u32 %s61, 1
        %s364 = scalar_lea.sflag [#allocation3], %s363
        %s365 = sand.u32 %s61, 1
        %s366 = smul.addr %s365, 64
        %s367 = scalar_lea.vmem [#allocation2], %s366
        %p368 = pneg %p74
        %p369 = pneg %p71
        %p370 = pneg %p95
        %p371 = pneg %p92
        %p372 = pneg %p116
        %p373 = pneg %p113
        %p374 = pneg %p137
        %p375 = pneg %p134
        %p376 = pneg %p158
        %p377 = pneg %p155
        %p378 = pneg %p179
        %p379 = pneg %p176
        %p380 = pneg %p200
        %p381 = pneg %p197
        %p382 = pneg %p221
        %p383 = pneg %p218
        %p384 = pneg %p242
        %p385 = pneg %p239
        %p386 = pneg %p268
        %p387 = pneg %p265
        %s388 = sand.u32 %s255, 1
        %s389 = scalar_lea.sflag [#allocation4], %s388
        %s390 = sand.u32 %s255, 1
        %s391 = smul.addr %s390, 64
        %s392 = scalar_lea.vmem [#allocation5], %s391
        %p393 = scmp.lt.s32.totalorder %s27, 1
        %s394 = scalar_select %p393, %s27, 1
        %s395 = smul.addr %s394, 8
        %s396 = smul.addr %s395, 8
        %s397 = scalar_lea.vmem %s0, %s396
        %v398 = vld [vmem:[%s397] sm:$0xff]
        %v399 = vld [vmem:[%s397 + $0x8] sm:$0xff]
        %v400 = vld [vmem:[%s397 + $0x10] sm:$0xff]
        %v401 = vld [vmem:[%s397 + $0x18] sm:$0xff]
        %v402 = vld [vmem:[%s397 + $0x20] sm:$0xff]
        %v403 = vld [vmem:[%s397 + $0x28] sm:$0xff]
        %v404 = vld [vmem:[%s397 + $0x30] sm:$0xff]
        %v405 = vld [vmem:[%s397 + $0x38] sm:$0xff]
        %v406 = vld [vmem:[%s351] sm:$0xff]
        %v407 = vld [vmem:[%s351 + $0x8] sm:$0xff]
        %v408 = vld [vmem:[%s351 + $0x10] sm:$0xff]
        %v409 = vld [vmem:[%s351 + $0x18] sm:$0xff]
        %v410 = vld [vmem:[%s351 + $0x20] sm:$0xff]
        %v411 = vld [vmem:[%s351 + $0x28] sm:$0xff]
        %v412 = vld [vmem:[%s351 + $0x30] sm:$0xff]
        %v413 = vld [vmem:[%s351 + $0x38] sm:$0xff]
        %v414 = vadd.f32 %v398, %v399
        %415 = vadd.xlane.f32.xlu0 %v414
        %v416 = vpop.xlane.xlu0 %415
        %v417 = vadd.f32 %v400, %v401
        %418 = vadd.xlane.f32.xlu0 %v417
        %v419 = vpop.xlane.xlu0 %418
        %v420 = vadd.f32 %v402, %v403
        %421 = vadd.xlane.f32.xlu0 %v420
        %v422 = vpop.xlane.xlu0 %421
        %v423 = vadd.f32 %v404, %v405
        %424 = vadd.xlane.f32.xlu0 %v423
        %v425 = vpop.xlane.xlu0 %424
        %v426 = vmul.f32 %v416, 0.00390625
        %v427 = vmul.f32 %v419, 0.00390625
        %v428 = vmul.f32 %v422, 0.00390625
        %v429 = vmul.f32 %v425, 0.00390625
        %v430 = vld [vmem:[%s2] sm:$0xff]
        %v431 = vld [vmem:[%s2 + $0x8] sm:$0xff]
        %v432 = vld [vmem:[%s2 + $0x10] sm:$0xff]
        %v433 = vld [vmem:[%s2 + $0x18] sm:$0xff]
        %v434 = vmul.f32 %v430, %v426
        %v435 = vmul.f32 %v431, %v427
        %v436 = vmul.f32 %v432, %v428
        %v437 = vmul.f32 %v433, %v429
        %vm438 = vcmask 15360
        %v439 = vsel %vm438, %v434, 0.0
        %v440 = vsel %vm438, %v435, 0.0
        %v441 = vadd.f32 %v439, %v440
        %v442 = vsel %vm438, %v436, 0.0
        %v443 = vadd.f32 %v441, %v442
        %v444 = vsel %vm438, %v437, 0.0
        %v445 = vadd.f32 %v443, %v444
        %v446 = vrot.slane %v445, 4
        %v447 = vadd.f32 %v445, %v446
        %v448 = vrot.slane %v447, 2
        %v449 = vadd.f32 %v447, %v448
        %v450 = vrot.slane %v449, 1
        %v451 = vadd.f32 %v449, %v450
        %v452 = vld [vmem:[%s3] sm:$0x1]
        %v453 = vadd.f32 %v451, %v452
        %v454 = vmax.f32 %v453, 0.0
        %v455 = vld [vmem:[%s4] sm:$0xff]
        %v456 = vld [vmem:[%s4 + $0x8] sm:$0xff]
        %v457 = vld [vmem:[%s4 + $0x10] sm:$0xff]
        %v458 = vld [vmem:[%s4 + $0x18] sm:$0xff]
        %v459 = vlaneseq
        %v460 = vshrl.u32 %v459, 7
        %v461 = vsub.s32 0, %v460
        %v462 = vrot.slane %v454, %v461
        %v463 = vmul.f32 %v455, %v462
        %v464 = vmul.f32 %v456, %v462
        %v465 = vmul.f32 %v457, %v462
        %v466 = vmul.f32 %v458, %v462
        %v467 = vsel %vm438, %v463, 0.0
        %468 = vadd.xlane.f32.xlu0 %v467
        %v469 = vpop.xlane.xlu0 %468
        %v470 = vsel %vm438, %v464, 0.0
        %471 = vadd.xlane.f32.xlu0 %v470
        %v472 = vpop.xlane.xlu0 %471
        %v473 = vsel %vm438, %v465, 0.0
        %474 = vadd.xlane.f32.xlu0 %v473
        %v475 = vpop.xlane.xlu0 %474
        %v476 = vsel %vm438, %v466, 0.0
        %477 = vadd.xlane.f32.xlu0 %v476
        %v478 = vpop.xlane.xlu0 %477
        %v479 = vld [vmem:[%s5] sm:$0xff]
        %v480 = vld [vmem:[%s5 + $0x8] sm:$0xff]
        %v481 = vld [vmem:[%s5 + $0x10] sm:$0xff]
        %v482 = vld [vmem:[%s5 + $0x18] sm:$0xff]
        %v483 = vadd.f32 %v469, %v479
        %v484 = vadd.f32 %v472, %v480
        %v485 = vadd.f32 %v475, %v481
        %v486 = vadd.f32 %v478, %v482
        %v487 = vxor.u32 %v483, 2147483648
        %v488 = vxor.u32 %v484, 2147483648
        %v489 = vxor.u32 %v485, 2147483648
        %v490 = vxor.u32 %v486, 2147483648
        %v491 = vmul.f32 %v487, 1.442695
        %v492 = vpow.pop %v491
        %v493 = vmul.f32 %v488, 1.442695
        %v494 = vpow.pop %v493
        %v495 = vmul.f32 %v489, 1.442695
        %v496 = vpow.pop %v495
        %v497 = vmul.f32 %v490, 1.442695
        %v498 = vpow.pop %v497
        %v499 = vadd.f32 %v492, 1.0
        %v500 = vadd.f32 %v494, 1.0
        %v501 = vadd.f32 %v496, 1.0
        %v502 = vadd.f32 %v498, 1.0
        %v503 = vrcp.pop %v499
        %v504 = vmul.f32 1.0, %v503
        %v505 = vrcp.pop %v500
        %v506 = vmul.f32 1.0, %v505
        %v507 = vrcp.pop %v501
        %v508 = vmul.f32 1.0, %v507
        %v509 = vrcp.pop %v502
        %v510 = vmul.f32 1.0, %v509
        %v511 = vadd.f32 %v406, %v407
        %512 = vadd.xlane.f32.xlu0 %v511
        %v513 = vpop.xlane.xlu0 %512
        %v514 = vadd.f32 %v408, %v409
        %515 = vadd.xlane.f32.xlu0 %v514
        %v516 = vpop.xlane.xlu0 %515
        %v517 = vadd.f32 %v410, %v411
        %518 = vadd.xlane.f32.xlu0 %v517
        %v519 = vpop.xlane.xlu0 %518
        %v520 = vadd.f32 %v412, %v413
        %521 = vadd.xlane.f32.xlu0 %v520
        %v522 = vpop.xlane.xlu0 %521
        %v523 = vmul.f32 %v513, 0.00390625
        %v524 = vmul.f32 %v516, 0.00390625
        %v525 = vmul.f32 %v519, 0.00390625
        %v526 = vmul.f32 %v522, 0.00390625
        %v527 = vld [vmem:[%s6] sm:$0xff]
        %v528 = vld [vmem:[%s6 + $0x8] sm:$0xff]
        %v529 = vld [vmem:[%s6 + $0x10] sm:$0xff]
        %v530 = vld [vmem:[%s6 + $0x18] sm:$0xff]
        %v531 = vmul.f32 %v527, %v523
        %v532 = vmul.f32 %v528, %v524
        %v533 = vmul.f32 %v529, %v525
        %v534 = vmul.f32 %v530, %v526
        %v535 = vsel %vm438, %v531, 0.0
        %v536 = vsel %vm438, %v532, 0.0
        %v537 = vadd.f32 %v535, %v536
        %v538 = vsel %vm438, %v533, 0.0
        %v539 = vadd.f32 %v537, %v538
        %v540 = vsel %vm438, %v534, 0.0
        %v541 = vadd.f32 %v539, %v540
        %v542 = vrot.slane %v541, 4
        %v543 = vadd.f32 %v541, %v542
        %v544 = vrot.slane %v543, 2
        %v545 = vadd.f32 %v543, %v544
        %v546 = vrot.slane %v545, 1
        %v547 = vadd.f32 %v545, %v546
        %v548 = vld [vmem:[%s7] sm:$0x1]
        %v549 = vadd.f32 %v547, %v548
        %v550 = vmax.f32 %v549, 0.0
        %v551 = vld [vmem:[%s8] sm:$0xff]
        %v552 = vld [vmem:[%s8 + $0x8] sm:$0xff]
        %v553 = vld [vmem:[%s8 + $0x10] sm:$0xff]
        %v554 = vld [vmem:[%s8 + $0x18] sm:$0xff]
        %v555 = vlaneseq
        %v556 = vshrl.u32 %v555, 7
        %v557 = vsub.s32 0, %v556
        %v558 = vrot.slane %v550, %v557
        %v559 = vmul.f32 %v551, %v558
        %v560 = vmul.f32 %v552, %v558
        %v561 = vmul.f32 %v553, %v558
        %v562 = vmul.f32 %v554, %v558
        %v563 = vsel %vm438, %v559, 0.0
        %564 = vadd.xlane.f32.xlu0 %v563
        %v565 = vpop.xlane.xlu0 %564
        %v566 = vsel %vm438, %v560, 0.0
        %567 = vadd.xlane.f32.xlu0 %v566
        %v568 = vpop.xlane.xlu0 %567
        %v569 = vsel %vm438, %v561, 0.0
        %570 = vadd.xlane.f32.xlu0 %v569
        %v571 = vpop.xlane.xlu0 %570
        %v572 = vsel %vm438, %v562, 0.0
        %573 = vadd.xlane.f32.xlu0 %v572
        %v574 = vpop.xlane.xlu0 %573
        %v575 = vld [vmem:[%s9] sm:$0xff]
        %v576 = vld [vmem:[%s9 + $0x8] sm:$0xff]
        %v577 = vld [vmem:[%s9 + $0x10] sm:$0xff]
        %v578 = vld [vmem:[%s9 + $0x18] sm:$0xff]
        %v579 = vadd.f32 %v565, %v575
        %v580 = vadd.f32 %v568, %v576
        %v581 = vadd.f32 %v571, %v577
        %v582 = vadd.f32 %v574, %v578
        %v583 = vxor.u32 %v579, 2147483648
        %v584 = vxor.u32 %v580, 2147483648
        %v585 = vxor.u32 %v581, 2147483648
        %v586 = vxor.u32 %v582, 2147483648
        %v587 = vmul.f32 %v583, 1.442695
        %v588 = vpow.pop %v587
        %v589 = vmul.f32 %v584, 1.442695
        %v590 = vpow.pop %v589
        %v591 = vmul.f32 %v585, 1.442695
        %v592 = vpow.pop %v591
        %v593 = vmul.f32 %v586, 1.442695
        %v594 = vpow.pop %v593
        %v595 = vadd.f32 %v588, 1.0
        %v596 = vadd.f32 %v590, 1.0
        %v597 = vadd.f32 %v592, 1.0
        %v598 = vadd.f32 %v594, 1.0
        %v599 = vrcp.pop %v595
        %v600 = vmul.f32 1.0, %v599
        %v601 = vrcp.pop %v596
        %v602 = vmul.f32 1.0, %v601
        %v603 = vrcp.pop %v597
        %v604 = vmul.f32 1.0, %v603
        %v605 = vrcp.pop %v598
        %v606 = vmul.f32 1.0, %v605
        %608 = vset.pattern.permute.xlu0 0
        %609 = vperm.xlu0 %608, %v504
        %v610 = vpop.permute.xlu0 %609
        %613 = vset.pattern.permute.xlu0 0
        %614 = vperm.xlu0 %613, %v506
        %v615 = vpop.permute.xlu0 %614
        %618 = vset.pattern.permute.xlu0 0
        %619 = vperm.xlu0 %618, %v508
        %v620 = vpop.permute.xlu0 %619
        %623 = vset.pattern.permute.xlu0 0
        %624 = vperm.xlu0 %623, %v510
        %v625 = vpop.permute.xlu0 %624
        %v627 = vmul.f32 %v398, %v610
        %v628 = vmul.f32 %v399, %v610
        %v629 = vmul.f32 %v400, %v615
        %v630 = vmul.f32 %v401, %v615
        %v631 = vmul.f32 %v402, %v620
        %v632 = vmul.f32 %v403, %v620
        %v633 = vmul.f32 %v404, %v625
        %v634 = vmul.f32 %v405, %v625
        %636 = vset.pattern.permute.xlu0 0
        %637 = vperm.xlu0 %636, %v600
        %v638 = vpop.permute.xlu0 %637
        %641 = vset.pattern.permute.xlu0 0
        %642 = vperm.xlu0 %641, %v602
        %v643 = vpop.permute.xlu0 %642
        %646 = vset.pattern.permute.xlu0 0
        %647 = vperm.xlu0 %646, %v604
        %v648 = vpop.permute.xlu0 %647
        %651 = vset.pattern.permute.xlu0 0
        %652 = vperm.xlu0 %651, %v606
        %v653 = vpop.permute.xlu0 %652
        %v655 = vmul.f32 %v406, %v638
        %v656 = vmul.f32 %v407, %v638
        %v657 = vmul.f32 %v408, %v643
        %v658 = vmul.f32 %v409, %v643
        %v659 = vmul.f32 %v410, %v648
        %v660 = vmul.f32 %v411, %v648
        %v661 = vmul.f32 %v412, %v653
        %v662 = vmul.f32 %v413, %v653
        %v663 = vadd.f32 %v627, %v655
        %v664 = vadd.f32 %v628, %v656
        %v665 = vadd.f32 %v629, %v657
        %v666 = vadd.f32 %v630, %v658
        %v667 = vadd.f32 %v631, %v659
        %v668 = vadd.f32 %v632, %v660
        %v669 = vadd.f32 %v633, %v661
        %v670 = vadd.f32 %v634, %v662
        %671 = vst [vmem:[%s392] sm:$0xff] %v663
        %672 = vst [vmem:[%s392 + $0x8] sm:$0xff] %v664
        %673 = vst [vmem:[%s392 + $0x10] sm:$0xff] %v665
        %674 = vst [vmem:[%s392 + $0x18] sm:$0xff] %v666
        %675 = vst [vmem:[%s392 + $0x20] sm:$0xff] %v667
        %676 = vst [vmem:[%s392 + $0x28] sm:$0xff] %v668
        %677 = vst [vmem:[%s392 + $0x30] sm:$0xff] %v669
        %678 = vst [vmem:[%s392 + $0x38] sm:$0xff] %v670
        %s679 = sand.u32 %s255, 1
        %s680 = scalar_lea.sflag [#allocation4], %s679
        %s681 = sand.u32 %s255, 1
        %s682 = smul.addr %s681, 64
        %s683 = scalar_lea.vmem [#allocation5], %s682
        // Predicated region
        $region65: #{tpu_custom_call.1} parent=59 // pred_check
          %p684 = pneg %p265
        $region66: #{tpu_custom_call.1} parent=59 // pred_check_branch
          %686 = sbr.rel (%p684) target = $region68
        $region67: #{tpu_custom_call.1} parent=59 // pred_region
          %s688 = ssub.s32 1024, 1024
          %689 = vsyncadd %s680, %s688
          %s690 = smul.addr %s27, 8
          %s691 = smul.addr %s690, 128
          %s692 = scalar_lea.hbm %s10, %s691
          %s693 = sshll.u32 %s683, 4
          %s694 = int_to_ptr.vmem [resolvable:$true] %s693
          %699 = dma.vmem_to_hbm [thread:$0]  %s694, 1024, %s692, %s680, 256, 256, 16
        $region68: #{tpu_custom_call.1} parent=59 // pred_fallthru
          _
      $region60: #{tpu_custom_call.1} parent=5 // pred_fallthru
        _
      %p700 = scmp.le.s32.totalorder 2, %s22
      // Predicated region
      $region69: #{tpu_custom_call.1} parent=5 // pred_check
        %p701 = pneg %p700
      $region70: #{tpu_custom_call.1} parent=5 // pred_check_branch
        %703 = sbr.rel (%p701) target = $region72
      $region71: #{tpu_custom_call.1} parent=5 // pred_region
        %s704 = ssub.s32 %s22, 2
        // Predicated region
        $region73: #{tpu_custom_call.1} parent=71 // pred_check
          %p705 = pneg %p271
        $region74: #{tpu_custom_call.1} parent=71 // pred_check_branch
          %707 = sbr.rel (%p705) target = $region76
        $region75: #{tpu_custom_call.1} parent=71 // pred_region
          %s708 = sand.u32 %s256, 1
          %s709 = scalar_lea.sflag [#allocation4], %s708
          %s710 = sand.u32 %s256, 1
          %s711 = smul.addr %s710, 64
          %s712 = scalar_lea.vmem [#allocation5], %s711
          %713 = dma.done %s709, 1024
        $region76: #{tpu_custom_call.1} parent=71 // pred_fallthru
          _
      $region72: #{tpu_custom_call.1} parent=5 // pred_fallthru
        _
    $region6: #{tpu_custom_call.1} parent=1 // loop_footer
      %s26 = sadd.s32 1, %s22
    $region7: #{tpu_custom_call.1} parent=1 // loop_footer_branch
      %21 = sbr.rel target = $region3
    $region8: #{tpu_custom_call.1} parent=1 // loop_exit
      _
    %714 = vsyncpa [#allocation3], 1
    %s715 = scalar_lea.sflag [#allocation3], 1
    %716 = vsyncpa %s715, 1
    %717 = vsyncpa [#allocation4], 1
    %s718 = scalar_lea.sflag [#allocation4], 1
    %719 = vsyncpa %s718, 1

</llo_original>
